<compile_context>
chip_gen: v5e
topology: v5e:2x2
jax: 0.10.0
libtpu: 0.0.40
codegen_flags: <defaults>
</compile_context>

<pallas_src>
import functools

import jax
import jax.numpy as jnp
from jax import lax
from jax.experimental import pallas as pl
from jax.experimental.pallas import tpu as pltpu

EPS = 1e-5


def _round_up(a, b):
    return (a + b - 1) // b * b


def conv_stats_kernel(x_ref, w_ref, h_ref, stats_ref, *, valid_len):
    """Phase 1: conv as K shifted matmuls + per-tile channel sum / sum-of-squares.

    x_ref:     (1, L_halo, C_in)   full halo'd length of one batch element (resident
                                   across the inner length-tile grid axis)
    w_ref:     (K, C_in, C_pad)    resident conv weights (output channels padded)
    h_ref:     (1, tile_l, C_pad)  conv output tile
    stats_ref: (1, 8, C_pad)       row 0 = sum, row 1 = sum of squares, rows 2..7 = 0
    """
    tile_l = h_ref.shape[1]
    c_pad = h_ref.shape[2]
    ksize = w_ref.shape[0]
    row0 = pl.multiple_of(pl.program_id(1) * tile_l, tile_l)

    # Conv1d (stride=1, padding='same') as K shifted matmuls on the MXU.
    acc = jnp.zeros((tile_l, c_pad), jnp.float32)
    for k in range(ksize):  # K is small & static -> unrolled
        xk = x_ref[0, pl.ds(row0 + k, tile_l), :]            # [tile_l, C_in]
        acc = acc + jnp.dot(xk, w_ref[k], preferred_element_type=jnp.float32)
    h_ref[0] = acc

    # Single-pass partial BN statistics; mask out rows beyond the true length so
    # padded length rows never pollute the global batch statistics.
    row_ids = row0 + lax.broadcasted_iota(jnp.int32, (tile_l, 1), 0)
    valid = (row_ids < valid_len).astype(jnp.float32)         # [tile_l, 1]
    hv = acc * valid
    ch_sum = jnp.sum(hv, axis=0, keepdims=True)               # [1, C_pad]
    ch_sumsq = jnp.sum(hv * hv, axis=0, keepdims=True)        # [1, C_pad]
    fill = jnp.zeros((6, c_pad), jnp.float32)
    stats_ref[0] = jnp.concatenate([ch_sum, ch_sumsq, fill], axis=0)


def bn_relu_kernel(h_ref, scale_ref, shift_ref, out_ref):
    """Phase 2: y = relu(h * scale + shift), written transposed (NCL layout).

    h_ref:     (1, tile_l, C_pad)
    scale_ref: (1, C_pad)   = gamma * rsqrt(var + eps)
    shift_ref: (1, C_pad)   = beta - mean * scale
    out_ref:   (1, C_pad, tile_l)
    """
    y = h_ref[0] * scale_ref[...] + shift_ref[...]            # [tile_l, C_pad]
    y = jnp.maximum(y, 0.0)
    out_ref[0] = y.T                                          # in-VMEM transpose (XLU)


@functools.partial(jax.jit, static_argnames=("kernel_size",))
def cnn_block_forward(x, weight, bias, gamma, beta, *, kernel_size):
    """x: [N, C_in, L] (NCL, like torch.nn.Conv1d). Returns [N, C_out, L].

    Matches Conv1d(stride=1, padding='same') -> BatchNorm1d (training-mode batch
    stats, eps=1e-5) -> ReLU.  `bias` is accepted for API parity but is
    mathematically dead: training-mode BN subtracts the per-channel mean, which
    cancels a constant per-channel bias exactly.
    """
    del bias
    n, c_in, length = x.shape
    c_out = weight.shape[0]
    ksize = kernel_size

    # ---- tiling choices -----------------------------------------------------
    c_pad = _round_up(c_out, 128)            # lane-dense output channels
    if length <= 512:
        tile_l = _round_up(length, 8)
        l_pad = tile_l
    else:
        tile_l = 512                         # 512-row tiles: good pipelining, small VMEM
        l_pad = _round_up(length, tile_l)
    n_lt = l_pad // tile_l
    l_halo = l_pad + ksize - 1
    pad_left = (ksize - 1) // 2

    # ---- cheap XLA-side layout prep (input is tiny: C_in channels) ----------
    # NCL -> NLC + 'same' halo + length padding (zeros).
    x_nlc = jnp.transpose(x, (0, 2, 1))                                  # [N, L, C_in]
    x_halo = jnp.pad(
        x_nlc, ((0, 0), (pad_left, l_halo - length - pad_left), (0, 0)))  # [N, L_halo, C_in]
    # Conv weight [C_out, C_in, K] -> [K, C_in, C_pad] with zero-padded channels.
    w = jnp.transpose(weight, (2, 1, 0))
    w = jnp.pad(w, ((0, 0), (0, 0), (0, c_pad - c_out)))

    # ---- phase 1: conv + per-tile partial BN statistics ---------------------
    # NOTE: one batch element's full (halo'd) length is kept VMEM-resident across
    # the inner length-tile axis (read once from HBM).  For very long sequences
    # this block should be switched to halo'd row-tiles via manual DMA.
    h, stats = pl.pallas_call(
        functools.partial(conv_stats_kernel, valid_len=length),
        out_shape=(
            jax.ShapeDtypeStruct((n, l_pad, c_pad), jnp.float32),
            jax.ShapeDtypeStruct((n * n_lt, 8, c_pad), jnp.float32),
        ),
        grid=(n, n_lt),
        in_specs=[
            pl.BlockSpec((1, l_halo, c_in), lambda i, j: (i, 0, 0)),     # x: once per batch
            pl.BlockSpec((ksize, c_in, c_pad), lambda i, j: (0, 0, 0)),  # weights resident
        ],
        out_specs=(
            pl.BlockSpec((1, tile_l, c_pad), lambda i, j: (i, j, 0)),
            pl.BlockSpec((1, 8, c_pad), lambda i, j: (i * n_lt + j, 0, 0)),
        ),
        compiler_params=pltpu.CompilerParams(
            dimension_semantics=("parallel", "parallel")),
    )(x_halo, w)

    # ---- tiny global reduce + folded BN scale/shift (XLA) -------------------
    count = float(n * length)
    ch_sum = jnp.sum(stats[:, 0, :], axis=0)                  # [C_pad]
    ch_sumsq = jnp.sum(stats[:, 1, :], axis=0)                # [C_pad]
    mean = ch_sum / count
    var = jnp.maximum(ch_sumsq / count - mean * mean, 0.0)    # biased var (training BN)
    inv_std = lax.rsqrt(var + EPS)
    gamma_p = jnp.pad(gamma, (0, c_pad - c_out))
    beta_p = jnp.pad(beta, (0, c_pad - c_out))
    scale = (gamma_p * inv_std).reshape(1, c_pad)
    shift = (beta_p - mean * gamma_p * inv_std).reshape(1, c_pad)

    # ---- phase 2: normalize + ReLU, output directly in NCL ------------------
    out_pad = pl.pallas_call(
        bn_relu_kernel,
        out_shape=jax.ShapeDtypeStruct((n, c_pad, l_pad), jnp.float32),
        grid=(n, n_lt),
        in_specs=[
            pl.BlockSpec((1, tile_l, c_pad), lambda i, j: (i, j, 0)),
            pl.BlockSpec((1, c_pad), lambda i, j: (0, 0)),
            pl.BlockSpec((1, c_pad), lambda i, j: (0, 0)),
        ],
        out_specs=pl.BlockSpec((1, c_pad, tile_l), lambda i, j: (i, 0, j)),
        compiler_params=pltpu.CompilerParams(
            dimension_semantics=("parallel", "parallel")),
    )(h, scale, shift)

    # Slice off channel / length padding -> [N, C_out, L] (NCL like the module).
    return out_pad[:, :c_out, :length]


def reference_forward(x, weight, bias, gamma, beta):
    """Pure-JAX reference: conv (f32) + batchnorm(batch stats) + relu."""
    h = lax.conv_general_dilated(
        x, weight,
        window_strides=(1,), padding="SAME",
        dimension_numbers=("NCH", "OIH", "NCH"),
        precision=lax.Precision.HIGHEST,
    ) + bias[None, :, None]
    mean = jnp.mean(h, axis=(0, 2), keepdims=True)
    var = jnp.mean((h - mean) ** 2, axis=(0, 2), keepdims=True)
    y = (h - mean) * lax.rsqrt(var + EPS)
    y = gamma[None, :, None] * y + beta[None, :, None]
    return jnp.maximum(y, 0.0)


if __name__ == "__main__":
    # CNNBlock(input_dim=4, output_dim=8, kernel_size=3, stride=1,
    #          padding='same', activation='relu')
    batch, input_dim, output_dim, length, kernel_size = 2, 4, 8, 16, 3

    key = jax.random.PRNGKey(0)
    kx, kw, kb = jax.random.split(key, 3)

    x = jax.random.normal(kx, (batch, input_dim, length), dtype=jnp.float32)

    fan_in = input_dim * kernel_size
    bound = 1.0 / (fan_in ** 0.5)
    weight = jax.random.uniform(
        kw, (output_dim, input_dim, kernel_size), jnp.float32, -bound, bound)
    bias = jax.random.uniform(kb, (output_dim,), jnp.float32, -bound, bound)
    gamma = jnp.ones((output_dim,), jnp.float32)
    beta = jnp.zeros((output_dim,), jnp.float32)

    out = cnn_block_forward(x, weight, bias, gamma, beta, kernel_size=kernel_size)
    out = jax.block_until_ready(out)

    ref = reference_forward(x, weight, bias, gamma, beta)
    assert out.shape == (batch, output_dim, length), out.shape
    # Kernel matmuls use default (fast MXU) precision vs the f32-HIGHEST reference,
    # so the tolerance is looser than bitwise f32.
    max_err = float(jnp.max(jnp.abs(out - ref)))
    assert max_err < 2e-2, max_err

    print("KERNEL_OK")
</pallas_src>

<mosaic_0001>
module attributes {stable_mosaic.version = 11 : i64} {
  func.func @conv_stats_kernel(%arg0: i32, %arg1: i32, %arg2: memref<1x18x4xf32, #tpu.memory_space<vmem>>, %arg3: memref<3x4x128xf32, #tpu.memory_space<vmem>>, %arg4: memref<1x16x128xf32, #tpu.memory_space<vmem>>, %arg5: memref<1x8x128xf32, #tpu.memory_space<vmem>>) attributes {dimension_semantics = [#tpu.dimension_semantics<parallel>, #tpu.dimension_semantics<parallel>], iteration_bounds = array<i64: 2, 1>, scalar_prefetch = 0 : i64, scratch_operands = 0 : i64, tpu.core_type = #tpu.core_type<tc>, window_params = [{transform_indices = @transform_0, window_bounds = array<i64: 1, 18, 4>}, {pipeline_mode = #tpu.pipeline_mode<synchronous>, transform_indices = @transform_1, window_bounds = array<i64: 3, 4, 128>}, {transform_indices = @transform_2, window_bounds = array<i64: 1, 16, 128>}, {transform_indices = @transform_3, window_bounds = array<i64: 1, 8, 128>}]} {
    %c16_i32 = arith.constant 16 : i32
    %0 = arith.muli %arg1, %c16_i32 : i32
    %1 = tpu.assume_multiple %0, 16 : i32
    %cst = arith.constant 0.000000e+00 : f32
    %2 = vector.broadcast %cst : f32 to vector<16x128xf32>
    %c0_i32 = arith.constant 0 : i32
    %3 = arith.addi %1, %c0_i32 : i32
    %c0 = arith.constant 0 : index
    %4 = arith.index_cast %3 : i32 to index
    %c0_0 = arith.constant 0 : index
    %5 = vector.load %arg2[%c0, %4, %c0_0] : memref<1x18x4xf32, #tpu.memory_space<vmem>>, vector<1x16x4xf32>
    %6 = vector.shape_cast %5 : vector<1x16x4xf32> to vector<16x4xf32>
    %c0_1 = arith.constant 0 : index
    %c0_2 = arith.constant 0 : index
    %c0_3 = arith.constant 0 : index
    %7 = vector.load %arg3[%c0_1, %c0_2, %c0_3] : memref<3x4x128xf32, #tpu.memory_space<vmem>>, vector<1x4x128xf32>
    %8 = vector.shape_cast %7 : vector<1x4x128xf32> to vector<4x128xf32>
    %cst_4 = arith.constant dense<0.000000e+00> : vector<16x128xf32>
    %9 = tpu.matmul %6, %8, %cst_4 {dimension_numbers = #tpu.dot_dimension_numbers<[1], [0], [0], [1], [0, 0, 1, 1], [], []>} : vector<16x4xf32>, vector<4x128xf32>, vector<16x128xf32> -> vector<16x128xf32>
    %10 = arith.addf %2, %9 : vector<16x128xf32>
    %c1_i32 = arith.constant 1 : i32
    %11 = arith.addi %1, %c1_i32 : i32
    %c0_5 = arith.constant 0 : index
    %12 = arith.index_cast %11 : i32 to index
    %c0_6 = arith.constant 0 : index
    %13 = vector.load %arg2[%c0_5, %12, %c0_6] : memref<1x18x4xf32, #tpu.memory_space<vmem>>, vector<1x16x4xf32>
    %14 = vector.shape_cast %13 : vector<1x16x4xf32> to vector<16x4xf32>
    %c1 = arith.constant 1 : index
    %c0_7 = arith.constant 0 : index
    %c0_8 = arith.constant 0 : index
    %15 = vector.load %arg3[%c1, %c0_7, %c0_8] : memref<3x4x128xf32, #tpu.memory_space<vmem>>, vector<1x4x128xf32>
    %16 = vector.shape_cast %15 : vector<1x4x128xf32> to vector<4x128xf32>
    %cst_9 = arith.constant dense<0.000000e+00> : vector<16x128xf32>
    %17 = tpu.matmul %14, %16, %cst_9 {dimension_numbers = #tpu.dot_dimension_numbers<[1], [0], [0], [1], [0, 0, 1, 1], [], []>} : vector<16x4xf32>, vector<4x128xf32>, vector<16x128xf32> -> vector<16x128xf32>
    %18 = arith.addf %10, %17 : vector<16x128xf32>
    %c2_i32 = arith.constant 2 : i32
    %19 = arith.addi %1, %c2_i32 : i32
    %c0_10 = arith.constant 0 : index
    %20 = arith.index_cast %19 : i32 to index
    %c0_11 = arith.constant 0 : index
    %21 = vector.load %arg2[%c0_10, %20, %c0_11] : memref<1x18x4xf32, #tpu.memory_space<vmem>>, vector<1x16x4xf32>
    %22 = vector.shape_cast %21 : vector<1x16x4xf32> to vector<16x4xf32>
    %c2 = arith.constant 2 : index
    %c0_12 = arith.constant 0 : index
    %c0_13 = arith.constant 0 : index
    %23 = vector.load %arg3[%c2, %c0_12, %c0_13] : memref<3x4x128xf32, #tpu.memory_space<vmem>>, vector<1x4x128xf32>
    %24 = vector.shape_cast %23 : vector<1x4x128xf32> to vector<4x128xf32>
    %cst_14 = arith.constant dense<0.000000e+00> : vector<16x128xf32>
    %25 = tpu.matmul %22, %24, %cst_14 {dimension_numbers = #tpu.dot_dimension_numbers<[1], [0], [0], [1], [0, 0, 1, 1], [], []>} : vector<16x4xf32>, vector<4x128xf32>, vector<16x128xf32> -> vector<16x128xf32>
    %26 = arith.addf %18, %25 : vector<16x128xf32>
    %c0_15 = arith.constant 0 : index
    %c0_16 = arith.constant 0 : index
    %c0_17 = arith.constant 0 : index
    %27 = vector.load %arg4[%c0_15, %c0_16, %c0_17] : memref<1x16x128xf32, #tpu.memory_space<vmem>>, vector<1x16x128xf32>
    %28 = vector.shape_cast %27 : vector<1x16x128xf32> to vector<16x128xf32>
    %29 = vector.shape_cast %26 : vector<16x128xf32> to vector<1x16x128xf32>
    tpu.vector_store %arg4[%c0_15, %c0_16, %c0_17], %29 {strides = array<i32>} : memref<1x16x128xf32, #tpu.memory_space<vmem>>, vector<1x16x128xf32>,
    %30 = tpu.iota {dimensions = array<i32: 0>} : vector<16x1xi32>
    %31 = vector.broadcast %1 : i32 to vector<16x1xi32>
    %32 = arith.addi %31, %30 : vector<16x1xi32>
    %c16_i32_18 = arith.constant 16 : i32
    %33 = vector.broadcast %c16_i32_18 : i32 to vector<16x1xi32>
    %34 = arith.cmpi slt, %32, %33 : vector<16x1xi32>
    %35 = arith.extui %34 : vector<16x1xi1> to vector<16x1xi32>
    %36 = arith.sitofp %35 : vector<16x1xi32> to vector<16x1xf32>
    %37 = vector.broadcast %36 : vector<16x1xf32> to vector<16x128xf32>
    %38 = arith.mulf %26, %37 : vector<16x128xf32>
    %cst_19 = arith.constant dense<0.000000e+00> : vector<128xf32>
    %39 = vector.multi_reduction <add>, %38, %cst_19 [0] : vector<16x128xf32> to vector<128xf32>
    %40 = vector.shape_cast %39 : vector<128xf32> to vector<1x128xf32>
    %41 = arith.mulf %38, %38 : vector<16x128xf32>
    %cst_20 = arith.constant dense<0.000000e+00> : vector<128xf32>
    %42 = vector.multi_reduction <add>, %41, %cst_20 [0] : vector<16x128xf32> to vector<128xf32>
    %43 = vector.shape_cast %42 : vector<128xf32> to vector<1x128xf32>
    %cst_21 = arith.constant 0.000000e+00 : f32
    %44 = vector.broadcast %cst_21 : f32 to vector<6x128xf32>
    %45 = tpu.concatenate %40, %43, %44 in 0 : vector<1x128xf32>, vector<1x128xf32>, vector<6x128xf32> -> vector<8x128xf32>
    %c0_22 = arith.constant 0 : index
    %c0_23 = arith.constant 0 : index
    %c0_24 = arith.constant 0 : index
    %46 = vector.load %arg5[%c0_22, %c0_23, %c0_24] : memref<1x8x128xf32, #tpu.memory_space<vmem>>, vector<1x8x128xf32>
    %47 = vector.shape_cast %46 : vector<1x8x128xf32> to vector<8x128xf32>
    %48 = vector.shape_cast %45 : vector<8x128xf32> to vector<1x8x128xf32>
    tpu.vector_store %arg5[%c0_22, %c0_23, %c0_24], %48 {strides = array<i32>} : memref<1x8x128xf32, #tpu.memory_space<vmem>>, vector<1x8x128xf32>,
    return
  }
  func.func @transform_0(%arg0: i32, %arg1: i32) -> (i32, i32, i32) {
    %c0_i32 = arith.constant 0 : i32
    %c0_i32_0 = arith.constant 0 : i32
    %c0_i32_1 = arith.constant 0 : i32
    return %arg0, %c0_i32, %c0_i32_0 : i32, i32, i32
  }
  func.func @transform_1(%arg0: i32, %arg1: i32) -> (i32, i32, i32) {
    %c0_i32 = arith.constant 0 : i32
    %c0_i32_0 = arith.constant 0 : i32
    %c0_i32_1 = arith.constant 0 : i32
    %c0_i32_2 = arith.constant 0 : i32
    return %c0_i32, %c0_i32_0, %c0_i32_1 : i32, i32, i32
  }
  func.func @transform_2(%arg0: i32, %arg1: i32) -> (i32, i32, i32) {
    %c0_i32 = arith.constant 0 : i32
    %c0_i32_0 = arith.constant 0 : i32
    return %arg0, %arg1, %c0_i32 : i32, i32, i32
  }
  func.func @transform_3(%arg0: i32, %arg1: i32) -> (i32, i32, i32) {
    %c1_i32 = arith.constant 1 : i32
    %0 = arith.muli %arg0, %c1_i32 : i32
    %1 = arith.addi %0, %arg1 : i32
    %c0_i32 = arith.constant 0 : i32
    %c0_i32_0 = arith.constant 0 : i32
    %c0_i32_1 = arith.constant 0 : i32
    return %1, %c0_i32, %c0_i32_0 : i32, i32, i32
  }
}

module attributes {stable_mosaic.version = 11 : i64} {
  func.func @bn_relu_kernel(%arg0: i32, %arg1: i32, %arg2: memref<1x16x128xf32, #tpu.memory_space<vmem>>, %arg3: memref<1x128xf32, #tpu.memory_space<vmem>>, %arg4: memref<1x128xf32, #tpu.memory_space<vmem>>, %arg5: memref<1x128x16xf32, #tpu.memory_space<vmem>>) attributes {dimension_semantics = [#tpu.dimension_semantics<parallel>, #tpu.dimension_semantics<parallel>], iteration_bounds = array<i64: 2, 1>, scalar_prefetch = 0 : i64, scratch_operands = 0 : i64, tpu.core_type = #tpu.core_type<tc>, window_params = [{transform_indices = @transform_0, window_bounds = array<i64: 1, 16, 128>}, {pipeline_mode = #tpu.pipeline_mode<synchronous>, transform_indices = @transform_1, window_bounds = array<i64: 1, 128>}, {pipeline_mode = #tpu.pipeline_mode<synchronous>, transform_indices = @transform_2, window_bounds = array<i64: 1, 128>}, {transform_indices = @transform_3, window_bounds = array<i64: 1, 128, 16>}]} {
    %c0 = arith.constant 0 : index
    %c0_0 = arith.constant 0 : index
    %c0_1 = arith.constant 0 : index
    %0 = vector.load %arg2[%c0, %c0_0, %c0_1] : memref<1x16x128xf32, #tpu.memory_space<vmem>>, vector<1x16x128xf32>
    %1 = vector.shape_cast %0 : vector<1x16x128xf32> to vector<16x128xf32>
    %c0_2 = arith.constant 0 : index
    %c0_3 = arith.constant 0 : index
    %2 = vector.load %arg3[%c0_2, %c0_3] : memref<1x128xf32, #tpu.memory_space<vmem>>, vector<1x128xf32>
    %3 = vector.broadcast %2 : vector<1x128xf32> to vector<16x128xf32>
    %4 = arith.mulf %1, %3 : vector<16x128xf32>
    %c0_4 = arith.constant 0 : index
    %c0_5 = arith.constant 0 : index
    %5 = vector.load %arg4[%c0_4, %c0_5] : memref<1x128xf32, #tpu.memory_space<vmem>>, vector<1x128xf32>
    %6 = vector.broadcast %5 : vector<1x128xf32> to vector<16x128xf32>
    %7 = arith.addf %4, %6 : vector<16x128xf32>
    %cst = arith.constant 0.000000e+00 : f32
    %8 = vector.broadcast %cst : f32 to vector<16x128xf32>
    %9 = arith.maximumf %7, %8 : vector<16x128xf32>
    %10 = tpu.transpose %9, [1, 0] : vector<16x128xf32> -> vector<128x16xf32>
    %c0_6 = arith.constant 0 : index
    %c0_7 = arith.constant 0 : index
    %c0_8 = arith.constant 0 : index
    %11 = vector.load %arg5[%c0_6, %c0_7, %c0_8] : memref<1x128x16xf32, #tpu.memory_space<vmem>>, vector<1x128x16xf32>
    %12 = vector.shape_cast %11 : vector<1x128x16xf32> to vector<128x16xf32>
    %13 = vector.shape_cast %10 : vector<128x16xf32> to vector<1x128x16xf32>
    tpu.vector_store %arg5[%c0_6, %c0_7, %c0_8], %13 {strides = array<i32>} : memref<1x128x16xf32, #tpu.memory_space<vmem>>, vector<1x128x16xf32>,
    return
  }
  func.func @transform_0(%arg0: i32, %arg1: i32) -> (i32, i32, i32) {
    %c0_i32 = arith.constant 0 : i32
    %c0_i32_0 = arith.constant 0 : i32
    return %arg0, %arg1, %c0_i32 : i32, i32, i32
  }
  func.func @transform_1(%arg0: i32, %arg1: i32) -> (i32, i32) {
    %c0_i32 = arith.constant 0 : i32
    %c0_i32_0 = arith.constant 0 : i32
    %c0_i32_1 = arith.constant 0 : i32
    return %c0_i32, %c0_i32_0 : i32, i32
  }
  func.func @transform_2(%arg0: i32, %arg1: i32) -> (i32, i32) {
    %c0_i32 = arith.constant 0 : i32
    %c0_i32_0 = arith.constant 0 : i32
    %c0_i32_1 = arith.constant 0 : i32
    return %c0_i32, %c0_i32_0 : i32, i32
  }
  func.func @transform_3(%arg0: i32, %arg1: i32) -> (i32, i32, i32) {
    %c0_i32 = arith.constant 0 : i32
    %c0_i32_0 = arith.constant 0 : i32
    return %arg0, %c0_i32, %arg1 : i32, i32, i32
  }
}

</mosaic_0001>

<llo_original>
// kernel: cnn_block_forward.3
$region0: #{cnn_block_forward.3}
  #allocation0 [shape = 'u32[]', space=smem, size = 0x4, offset = 0x4, fixed_abs, tag = 'smem constant byte address 0x4 - core index']
  #allocation1 [shape = 'u32[72,128]{1,0:T(1,128)}', space=vmem, size = 0x9000, scoped, tag = 'internal scratch']
  %s0 = inlined_call_operand.vmem [shape: f32[2,16,128], index: 0, kind: input, shape index: {}]
  %s1 = inlined_call_operand.vmem [shape: f32[1,128], index: 1, kind: input, shape index: {}]
  %s2 = inlined_call_operand.vmem [shape: f32[1,128], index: 2, kind: input, shape index: {}]
  %s3 = inlined_call_operand.vmem [shape: f32[2,128,16], index: 3, kind: output, shape index: {}]
  %s4 = sld [smem:[#allocation0]]
  $region45: #{cnn_block_forward.3} parent=0
    _
  %s6 = ssub.s32 1, %s4
  %s7 = scalar_select 0, %s6, %s4
  loop: start=0, step=1, limit=4
  $region2: #{cnn_block_forward.3} parent=0 // loop_pre_header
    _
  $region3: #{cnn_block_forward.3} parent=0 // loop_header
    %s9 = sphi 0, %s13
    %p10 = scmp.ge.s32.totalorder %s9, 4
    %s16 = sphi 0, %s28
    %s17 = sphi 0, %s24
    %s18 = sphi 0, %s16
    %s19 = sphi 0, %s17
    %s20 = sphi 0, %s18
    %s21 = sphi 0, %s19
    %s33 = sphi 0, %s35
    %s36 = sphi 0, %s33
    %s37 = sphi 0, %s36
    %s53 = sphi 0, %s37
    %s57 = sphi 0, %s57
    %s59 = sphi 0, %s57
    %s60 = sphi 0, %s59
    %s74 = sphi 0, %s60
    %s78 = sphi 0, %s78
    %s80 = sphi 0, %s78
    %s81 = sphi 0, %s80
    %s95 = sphi 0, %s81
    %s103 = sphi 0, %s105
    %s106 = sphi 0, %s103
    %s107 = sphi 0, %s106
    %s123 = sphi 0, %s107
  $region4: #{cnn_block_forward.3} parent=0 // loop_header_branch
    %12 = sbr.rel (%p10) target = $region8
  $region5: #{cnn_block_forward.3} parent=0 // loop_body
    %s14 = ssub.s32 %s9, 1
    %s15 = ssub.s32 %s9, 2
    %s22 = sadd.s32 1, %s17
    %p23 = scmp.ge.s32.totalorder %s22, 1
    %s24 = scalar_select %p23, 0, %s22
    %s25 = sadd.s32 1, %s16
    %s26 = scalar_select %p23, %s25, %s16
    %p27 = scmp.ge.s32.totalorder %s26, 2
    %s28 = scalar_select %p27, 0, %s26
    %s29 = ssub.s32 %s16, %s28
    %s30 = ssub.s32 %s17, %s24
    %s31 = sor.u32 %s29, %s30
    %p32 = scmp.eq.s32.totalorder %s31, 0
    %s34 = sadd.s32 %s33, 1
    %s35 = scalar_select %p32, %s33, %s34
    %p38 = pneg %p32
    %p39 = scmp.eq.s32.totalorder %s9, 1
    %p40 = por %p38, %p39
    %p41 = scmp.ne.s32.totalorder %s33, %s36
    %p42 = scmp.eq.s32.totalorder %s9, 0
    %p43 = por %p41, %p42
    %p44 = scmp.ne.s32.totalorder %s33, %s36
    %p45 = scmp.eq.s32.totalorder %s14, 1
    %p46 = por %p44, %p45
    %p47 = scmp.ne.s32.totalorder %s36, %s37
    %p48 = scmp.eq.s32.totalorder %s14, 0
    %p49 = por %p47, %p48
    %p50 = scmp.ne.s32.totalorder %s36, %s37
    %p51 = scmp.eq.s32.totalorder %s15, 1
    %p52 = por %p50, %p51
    %p54 = scmp.ne.s32.totalorder %s37, %s53
    %p55 = scmp.eq.s32.totalorder %s15, 0
    %p56 = por %p54, %p55
    %s58 = sadd.s32 %s57, 1
    %p61 = scmp.eq.s32.totalorder %s9, 1
    %p62 = scmp.ne.s32.totalorder %s57, %s59
    %p63 = scmp.eq.s32.totalorder %s9, 0
    %p64 = por %p62, %p63
    %p65 = scmp.ne.s32.totalorder %s57, %s59
    %p66 = scmp.eq.s32.totalorder %s14, 1
    %p67 = por %p65, %p66
    %p68 = scmp.ne.s32.totalorder %s59, %s60
    %p69 = scmp.eq.s32.totalorder %s14, 0
    %p70 = por %p68, %p69
    %p71 = scmp.ne.s32.totalorder %s59, %s60
    %p72 = scmp.eq.s32.totalorder %s15, 1
    %p73 = por %p71, %p72
    %p75 = scmp.ne.s32.totalorder %s60, %s74
    %p76 = scmp.eq.s32.totalorder %s15, 0
    %p77 = por %p75, %p76
    %s79 = sadd.s32 %s78, 1
    %p82 = scmp.eq.s32.totalorder %s9, 1
    %p83 = scmp.ne.s32.totalorder %s78, %s80
    %p84 = scmp.eq.s32.totalorder %s9, 0
    %p85 = por %p83, %p84
    %p86 = scmp.ne.s32.totalorder %s78, %s80
    %p87 = scmp.eq.s32.totalorder %s14, 1
    %p88 = por %p86, %p87
    %p89 = scmp.ne.s32.totalorder %s80, %s81
    %p90 = scmp.eq.s32.totalorder %s14, 0
    %p91 = por %p89, %p90
    %p92 = scmp.ne.s32.totalorder %s80, %s81
    %p93 = scmp.eq.s32.totalorder %s15, 1
    %p94 = por %p92, %p93
    %p96 = scmp.ne.s32.totalorder %s81, %s95
    %p97 = scmp.eq.s32.totalorder %s15, 0
    %p98 = por %p96, %p97
    %s99 = ssub.s32 %s16, %s28
    %s100 = ssub.s32 %s17, %s24
    %s101 = sor.u32 %s99, %s100
    %p102 = scmp.eq.s32.totalorder %s101, 0
    %s104 = sadd.s32 %s103, 1
    %s105 = scalar_select %p102, %s103, %s104
    %p108 = pneg %p102
    %p109 = scmp.eq.s32.totalorder %s9, 1
    %p110 = por %p108, %p109
    %p111 = scmp.ne.s32.totalorder %s103, %s106
    %p112 = scmp.eq.s32.totalorder %s9, 0
    %p113 = por %p111, %p112
    %p114 = scmp.ne.s32.totalorder %s103, %s106
    %p115 = scmp.eq.s32.totalorder %s14, 1
    %p116 = por %p114, %p115
    %p117 = scmp.ne.s32.totalorder %s106, %s107
    %p118 = scmp.eq.s32.totalorder %s14, 0
    %p119 = por %p117, %p118
    %p120 = scmp.ne.s32.totalorder %s106, %s107
    %p121 = scmp.eq.s32.totalorder %s15, 1
    %p122 = por %p120, %p121
    %p124 = scmp.ne.s32.totalorder %s107, %s123
    %p125 = scmp.eq.s32.totalorder %s15, 0
    %p126 = por %p124, %p125
    %p127 = scmp.le.s32.totalorder 1, %s9
    %p128 = scmp.lt.s32.totalorder %s9, 3
    %p129 = pnand %p127, %p128
    %p130 = pneg %p129
    // Predicated region
    $region9: #{cnn_block_forward.3} parent=5 // pred_check
      _
    $region10: #{cnn_block_forward.3} parent=5 // pred_check_branch
      %132 = sbr.rel (%p129) target = $region12
    $region11: #{cnn_block_forward.3} parent=5 // pred_region
      %s133 = ssub.s32 %s9, 1
      // Predicated region
      $region13: #{cnn_block_forward.3} parent=11 // pred_check
        %p134 = pneg %p70
      $region14: #{cnn_block_forward.3} parent=11 // pred_check_branch
        %136 = sbr.rel (%p134) target = $region16
      $region15: #{cnn_block_forward.3} parent=11 // pred_region
        _
      $region16: #{cnn_block_forward.3} parent=11 // pred_fallthru
        _
      // Predicated region
      $region17: #{cnn_block_forward.3} parent=11 // pred_check
        %p137 = pneg %p91
      $region18: #{cnn_block_forward.3} parent=11 // pred_check_branch
        %139 = sbr.rel (%p137) target = $region20
      $region19: #{cnn_block_forward.3} parent=11 // pred_region
        _
      $region20: #{cnn_block_forward.3} parent=11 // pred_fallthru
        _
    $region12: #{cnn_block_forward.3} parent=5 // pred_fallthru
      _
    %p140 = scmp.lt.s32.totalorder %s9, 2
    // Predicated region
    $region21: #{cnn_block_forward.3} parent=5 // pred_check
      %p141 = pneg %p140
    $region22: #{cnn_block_forward.3} parent=5 // pred_check_branch
      %143 = sbr.rel (%p141) target = $region24
    $region23: #{cnn_block_forward.3} parent=5 // pred_region
      // Predicated region
      $region25: #{cnn_block_forward.3} parent=23 // pred_check
        %p144 = pneg %p43
      $region26: #{cnn_block_forward.3} parent=23 // pred_check_branch
        %146 = sbr.rel (%p144) target = $region28
      $region27: #{cnn_block_forward.3} parent=23 // pred_region
        %s147 = smul.u32 2, %s17
        %p148 = scmp.lt.s32.totalorder %s16, 1
        %s149 = scalar_select %p148, %s16, 1
        %p150 = scmp.lt.s32.totalorder %s147, 1
        %s151 = scalar_select %p150, %s147, 1
        %s152 = smul.addr %s149, 2
        %s153 = sadd.s32 %s151, %s152
        %s154 = smul.addr %s153, 8
        %s155 = scalar_lea.vmem %s0, %s154
        %s156 = smul.u32 2, %s17
      $region28: #{cnn_block_forward.3} parent=23 // pred_fallthru
        _
    $region24: #{cnn_block_forward.3} parent=5 // pred_fallthru
      _
    %p157 = scmp.le.s32.totalorder 1, %s9
    %p158 = scmp.lt.s32.totalorder %s9, 3
    %p159 = pnand %p157, %p158
    %p160 = pneg %p159
    // Predicated region
    $region29: #{cnn_block_forward.3} parent=5 // pred_check
      _
    $region30: #{cnn_block_forward.3} parent=5 // pred_check_branch
      %162 = sbr.rel (%p159) target = $region32
    $region31: #{cnn_block_forward.3} parent=5 // pred_region
      %s163 = ssub.s32 %s9, 1
      %s164 = smul.u32 2, %s19
      %p165 = scmp.lt.s32.totalorder %s18, 1
      %s166 = scalar_select %p165, %s18, 1
      %p167 = scmp.lt.s32.totalorder %s164, 1
      %s168 = scalar_select %p167, %s164, 1
      %s169 = smul.addr %s166, 2
      %s170 = sadd.s32 %s168, %s169
      %s171 = smul.addr %s170, 8
      %s172 = scalar_lea.vmem %s0, %s171
      %p173 = pneg %p49
      %p174 = pneg %p46
      %p175 = pneg %p70
      %p176 = pneg %p67
      %p177 = pneg %p91
      %p178 = pneg %p88
      %p179 = pneg %p119
      %p180 = pneg %p116
      %p181 = scmp.lt.s32.totalorder %s18, 1
      %s182 = scalar_select %p181, %s18, 1
      %p183 = scmp.lt.s32.totalorder %s19, 0
      %s184 = scalar_select %p183, %s19, 0
      %s185 = smul.addr %s182, 16
      %s186 = sadd.s32 %s184, %s185
      %s187 = smul.addr %s186, 8
      %s188 = scalar_lea.vmem %s3, %s187
      %s189 = smul.u32 2, %s19
      %p190 = scmp.lt.s32.totalorder %s18, 1
      %s191 = scalar_select %p190, %s18, 1
      %p192 = scmp.lt.s32.totalorder %s189, 1
      %s193 = scalar_select %p192, %s189, 1
      %s194 = smul.addr %s191, 2
      %s195 = sadd.s32 %s193, %s194
      %s196 = smul.addr %s195, 8
      %s197 = scalar_lea.vmem %s0, %s196
      %s198 = smul.u32 2, %s19
      %p199 = scmp.lt.s32.totalorder %s18, 1
      %s200 = scalar_select %p199, %s18, 1
      %p201 = scmp.lt.s32.totalorder %s19, 0
      %s202 = scalar_select %p201, %s19, 0
      %s203 = smul.addr %s200, 16
      %s204 = sadd.s32 %s202, %s203
      %s205 = smul.addr %s204, 8
      %s206 = scalar_lea.vmem %s3, %s205
      %v207 = vld [vmem:[%s197] sm:$0xff]
      %v208 = vld [vmem:[%s197 + $0x8] sm:$0xff]
      %v209 = vld [vmem:[%s1] sm:$0x1]
      %v211 = vperm.slane %v209, 0
      %v213 = vmul.f32 %v207, %v211
      %v214 = vmul.f32 %v208, %v211
      %v215 = vld [vmem:[%s2] sm:$0x1]
      %v217 = vperm.slane %v215, 0
      %v219 = vadd.f32 %v213, %v217
      %v220 = vadd.f32 %v214, %v217
      %v221 = vmax.f32 %v219, 0.0
      %v222 = vmax.f32 %v220, 0.0
      %223 = vxpose.xlu0.b32.start [1/16] %v221, 128
      %224 = vxpose.xlu0.b32.cont [2/16] %v222, 128
      %225 = vxpose.xlu0.b32.cont [3/16] 0.0, 128
      %226 = vxpose.xlu0.b32.cont [4/16] 0.0, 128
      %227 = vxpose.xlu0.b32.cont [5/16] 0.0, 128
      %228 = vxpose.xlu0.b32.cont [6/16] 0.0, 128
      %229 = vxpose.xlu0.b32.cont [7/16] 0.0, 128
      %230 = vxpose.xlu0.b32.cont [8/16] 0.0, 128
      %231 = vxpose.xlu0.b32.cont [9/16] 0.0, 128
      %232 = vxpose.xlu0.b32.cont [10/16] 0.0, 128
      %233 = vxpose.xlu0.b32.cont [11/16] 0.0, 128
      %234 = vxpose.xlu0.b32.cont [12/16] 0.0, 128
      %235 = vxpose.xlu0.b32.cont [13/16] 0.0, 128
      %236 = vxpose.xlu0.b32.cont [14/16] 0.0, 128
      %237 = vxpose.xlu0.b32.cont [15/16] 0.0, 128
      %238 = vxpose.xlu0.b32.end [16/16] 0.0, 128
      %v239 = vpop.trf.xlu0
      %v240 = vpop.trf.xlu0
      %v241 = vpop.trf.xlu0
      %v242 = vpop.trf.xlu0
      %v243 = vpop.trf.xlu0
      %v244 = vpop.trf.xlu0
      %v245 = vpop.trf.xlu0
      %v246 = vpop.trf.xlu0
      %v247 = vpop.trf.xlu0
      %v248 = vpop.trf.xlu0
      %v249 = vpop.trf.xlu0
      %v250 = vpop.trf.xlu0
      %v251 = vpop.trf.xlu0
      %v252 = vpop.trf.xlu0
      %v253 = vpop.trf.xlu0
      %v254 = vpop.trf.xlu0
      %vm255 = vcmask 130048
      %256 = vst.msk [vmem:[%s206] sm:$0xff] %vm255, %v239
      %257 = vst.msk [vmem:[%s206 + $0x8] sm:$0xff] %vm255, %v240
      %258 = vst.msk [vmem:[%s206 + $0x10] sm:$0xff] %vm255, %v241
      %259 = vst.msk [vmem:[%s206 + $0x18] sm:$0xff] %vm255, %v242
      %260 = vst.msk [vmem:[%s206 + $0x20] sm:$0xff] %vm255, %v243
      %261 = vst.msk [vmem:[%s206 + $0x28] sm:$0xff] %vm255, %v244
      %262 = vst.msk [vmem:[%s206 + $0x30] sm:$0xff] %vm255, %v245
      %263 = vst.msk [vmem:[%s206 + $0x38] sm:$0xff] %vm255, %v246
      %264 = vst.msk [vmem:[%s206 + $0x40] sm:$0xff] %vm255, %v247
      %265 = vst.msk [vmem:[%s206 + $0x48] sm:$0xff] %vm255, %v248
      %266 = vst.msk [vmem:[%s206 + $0x50] sm:$0xff] %vm255, %v249
      %267 = vst.msk [vmem:[%s206 + $0x58] sm:$0xff] %vm255, %v250
      %268 = vst.msk [vmem:[%s206 + $0x60] sm:$0xff] %vm255, %v251
      %269 = vst.msk [vmem:[%s206 + $0x68] sm:$0xff] %vm255, %v252
      %270 = vst.msk [vmem:[%s206 + $0x70] sm:$0xff] %vm255, %v253
      %271 = vst.msk [vmem:[%s206 + $0x78] sm:$0xff] %vm255, %v254
      %p272 = scmp.lt.s32.totalorder %s18, 1
      %s273 = scalar_select %p272, %s18, 1
      %p274 = scmp.lt.s32.totalorder %s19, 0
      %s275 = scalar_select %p274, %s19, 0
      %s276 = smul.addr %s273, 16
      %s277 = sadd.s32 %s275, %s276
      %s278 = smul.addr %s277, 8
      %s279 = scalar_lea.vmem %s3, %s278
      // Predicated region
      $region33: #{cnn_block_forward.3} parent=31 // pred_check
        %p280 = pneg %p116
      $region34: #{cnn_block_forward.3} parent=31 // pred_check_branch
        %282 = sbr.rel (%p280) target = $region36
      $region35: #{cnn_block_forward.3} parent=31 // pred_region
        _
      $region36: #{cnn_block_forward.3} parent=31 // pred_fallthru
        _
    $region32: #{cnn_block_forward.3} parent=5 // pred_fallthru
      _
    %p283 = scmp.le.s32.totalorder 2, %s9
    // Predicated region
    $region37: #{cnn_block_forward.3} parent=5 // pred_check
      %p284 = pneg %p283
    $region38: #{cnn_block_forward.3} parent=5 // pred_check_branch
      %286 = sbr.rel (%p284) target = $region40
    $region39: #{cnn_block_forward.3} parent=5 // pred_region
      %s287 = ssub.s32 %s9, 2
      // Predicated region
      $region41: #{cnn_block_forward.3} parent=39 // pred_check
        %p288 = pneg %p122
      $region42: #{cnn_block_forward.3} parent=39 // pred_check_branch
        %290 = sbr.rel (%p288) target = $region44
      $region43: #{cnn_block_forward.3} parent=39 // pred_region
        %p291 = scmp.lt.s32.totalorder %s20, 1
        %s292 = scalar_select %p291, %s20, 1
        %p293 = scmp.lt.s32.totalorder %s21, 0
        %s294 = scalar_select %p293, %s21, 0
        %s295 = smul.addr %s292, 16
        %s296 = sadd.s32 %s294, %s295
        %s297 = smul.addr %s296, 8
        %s298 = scalar_lea.vmem %s3, %s297
      $region44: #{cnn_block_forward.3} parent=39 // pred_fallthru
        _
    $region40: #{cnn_block_forward.3} parent=5 // pred_fallthru
      _
  $region6: #{cnn_block_forward.3} parent=0 // loop_footer
    %s13 = sadd.s32 1, %s9
  $region7: #{cnn_block_forward.3} parent=0 // loop_footer_branch
    %8 = sbr.rel target = $region3
  $region8: #{cnn_block_forward.3} parent=0 // loop_exit
    _

// kernel: cnn_block_forward.2
$region0: #{cnn_block_forward.2}
  #allocation0 [shape = 'u32[]', space=smem, size = 0x4, offset = 0x4, fixed_abs, tag = 'smem constant byte address 0x4 - core index']
  #allocation1 [shape = 'u32[72,128]{1,0:T(1,128)}', space=vmem, size = 0x9000, scoped, tag = 'internal scratch']
  %s0 = inlined_call_operand.vmem [shape: f32[2,18,4], index: 0, kind: input, shape index: {}]
  %s1 = inlined_call_operand.vmem [shape: f32[3,4,128], index: 1, kind: input, shape index: {}]
  %s2 = inlined_call_operand.vmem [shape: f32[2,16,128], index: 2, kind: output, shape index: {0}]
  %s3 = inlined_call_operand.vmem [shape: f32[2,8,128], index: 3, kind: output, shape index: {1}]
  %4 = xla_tuple %s2, %s3
  %s5 = sld [smem:[#allocation0]]
  $region49: #{cnn_block_forward.2} parent=0
    _
  %s7 = ssub.s32 1, %s5
  %s8 = scalar_select 0, %s7, %s5
  loop: start=0, step=1, limit=4
  $region2: #{cnn_block_forward.2} parent=0 // loop_pre_header
    _
  $region3: #{cnn_block_forward.2} parent=0 // loop_header
    %s10 = sphi 0, %s14
    %p11 = scmp.ge.s32.totalorder %s10, 4
    %s17 = sphi 0, %s29
    %s18 = sphi 0, %s25
    %s19 = sphi 0, %s17
    %s20 = sphi 0, %s18
    %s21 = sphi 0, %s19
    %s22 = sphi 0, %s20
    %s32 = sphi 0, %s34
    %s35 = sphi 0, %s32
    %s36 = sphi 0, %s35
    %s52 = sphi 0, %s36
    %s56 = sphi 0, %s56
    %s58 = sphi 0, %s56
    %s59 = sphi 0, %s58
    %s73 = sphi 0, %s59
    %s81 = sphi 0, %s83
    %s84 = sphi 0, %s81
    %s85 = sphi 0, %s84
    %s101 = sphi 0, %s85
    %s109 = sphi 0, %s111
    %s112 = sphi 0, %s109
    %s113 = sphi 0, %s112
    %s129 = sphi 0, %s113
  $region4: #{cnn_block_forward.2} parent=0 // loop_header_branch
    %13 = sbr.rel (%p11) target = $region8
  $region5: #{cnn_block_forward.2} parent=0 // loop_body
    %s15 = ssub.s32 %s10, 1
    %s16 = ssub.s32 %s10, 2
    %s23 = sadd.s32 1, %s18
    %p24 = scmp.ge.s32.totalorder %s23, 1
    %s25 = scalar_select %p24, 0, %s23
    %s26 = sadd.s32 1, %s17
    %s27 = scalar_select %p24, %s26, %s17
    %p28 = scmp.ge.s32.totalorder %s27, 2
    %s29 = scalar_select %p28, 0, %s27
    %s30 = ssub.s32 %s17, %s29
    %p31 = scmp.eq.s32.totalorder %s30, 0
    %s33 = sadd.s32 %s32, 1
    %s34 = scalar_select %p31, %s32, %s33
    %p37 = pneg %p31
    %p38 = scmp.eq.s32.totalorder %s10, 1
    %p39 = por %p37, %p38
    %p40 = scmp.ne.s32.totalorder %s32, %s35
    %p41 = scmp.eq.s32.totalorder %s10, 0
    %p42 = por %p40, %p41
    %p43 = scmp.ne.s32.totalorder %s32, %s35
    %p44 = scmp.eq.s32.totalorder %s15, 1
    %p45 = por %p43, %p44
    %p46 = scmp.ne.s32.totalorder %s35, %s36
    %p47 = scmp.eq.s32.totalorder %s15, 0
    %p48 = por %p46, %p47
    %p49 = scmp.ne.s32.totalorder %s35, %s36
    %p50 = scmp.eq.s32.totalorder %s16, 1
    %p51 = por %p49, %p50
    %p53 = scmp.ne.s32.totalorder %s36, %s52
    %p54 = scmp.eq.s32.totalorder %s16, 0
    %p55 = por %p53, %p54
    %s57 = sadd.s32 %s56, 1
    %p60 = scmp.eq.s32.totalorder %s10, 1
    %p61 = scmp.ne.s32.totalorder %s56, %s58
    %p62 = scmp.eq.s32.totalorder %s10, 0
    %p63 = por %p61, %p62
    %p64 = scmp.ne.s32.totalorder %s56, %s58
    %p65 = scmp.eq.s32.totalorder %s15, 1
    %p66 = por %p64, %p65
    %p67 = scmp.ne.s32.totalorder %s58, %s59
    %p68 = scmp.eq.s32.totalorder %s15, 0
    %p69 = por %p67, %p68
    %p70 = scmp.ne.s32.totalorder %s58, %s59
    %p71 = scmp.eq.s32.totalorder %s16, 1
    %p72 = por %p70, %p71
    %p74 = scmp.ne.s32.totalorder %s59, %s73
    %p75 = scmp.eq.s32.totalorder %s16, 0
    %p76 = por %p74, %p75
    %s77 = ssub.s32 %s17, %s29
    %s78 = ssub.s32 %s18, %s25
    %s79 = sor.u32 %s77, %s78
    %p80 = scmp.eq.s32.totalorder %s79, 0
    %s82 = sadd.s32 %s81, 1
    %s83 = scalar_select %p80, %s81, %s82
    %p86 = pneg %p80
    %p87 = scmp.eq.s32.totalorder %s10, 1
    %p88 = por %p86, %p87
    %p89 = scmp.ne.s32.totalorder %s81, %s84
    %p90 = scmp.eq.s32.totalorder %s10, 0
    %p91 = por %p89, %p90
    %p92 = scmp.ne.s32.totalorder %s81, %s84
    %p93 = scmp.eq.s32.totalorder %s15, 1
    %p94 = por %p92, %p93
    %p95 = scmp.ne.s32.totalorder %s84, %s85
    %p96 = scmp.eq.s32.totalorder %s15, 0
    %p97 = por %p95, %p96
    %p98 = scmp.ne.s32.totalorder %s84, %s85
    %p99 = scmp.eq.s32.totalorder %s16, 1
    %p100 = por %p98, %p99
    %p102 = scmp.ne.s32.totalorder %s85, %s101
    %p103 = scmp.eq.s32.totalorder %s16, 0
    %p104 = por %p102, %p103
    %s105 = sadd.s32 %s17, %s18
    %s106 = sadd.s32 %s29, %s25
    %s107 = ssub.s32 %s105, %s106
    %p108 = scmp.eq.s32.totalorder %s107, 0
    %s110 = sadd.s32 %s109, 1
    %s111 = scalar_select %p108, %s109, %s110
    %p114 = pneg %p108
    %p115 = scmp.eq.s32.totalorder %s10, 1
    %p116 = por %p114, %p115
    %p117 = scmp.ne.s32.totalorder %s109, %s112
    %p118 = scmp.eq.s32.totalorder %s10, 0
    %p119 = por %p117, %p118
    %p120 = scmp.ne.s32.totalorder %s109, %s112
    %p121 = scmp.eq.s32.totalorder %s15, 1
    %p122 = por %p120, %p121
    %p123 = scmp.ne.s32.totalorder %s112, %s113
    %p124 = scmp.eq.s32.totalorder %s15, 0
    %p125 = por %p123, %p124
    %p126 = scmp.ne.s32.totalorder %s112, %s113
    %p127 = scmp.eq.s32.totalorder %s16, 1
    %p128 = por %p126, %p127
    %p130 = scmp.ne.s32.totalorder %s113, %s129
    %p131 = scmp.eq.s32.totalorder %s16, 0
    %p132 = por %p130, %p131
    %p133 = scmp.le.s32.totalorder 1, %s10
    %p134 = scmp.lt.s32.totalorder %s10, 3
    %p135 = pnand %p133, %p134
    %p136 = pneg %p135
    // Predicated region
    $region9: #{cnn_block_forward.2} parent=5 // pred_check
      _
    $region10: #{cnn_block_forward.2} parent=5 // pred_check_branch
      %138 = sbr.rel (%p135) target = $region12
    $region11: #{cnn_block_forward.2} parent=5 // pred_region
      %s139 = ssub.s32 %s10, 1
      // Predicated region
      $region13: #{cnn_block_forward.2} parent=11 // pred_check
        %p140 = pneg %p69
      $region14: #{cnn_block_forward.2} parent=11 // pred_check_branch
        %142 = sbr.rel (%p140) target = $region16
      $region15: #{cnn_block_forward.2} parent=11 // pred_region
        _
      $region16: #{cnn_block_forward.2} parent=11 // pred_fallthru
        _
    $region12: #{cnn_block_forward.2} parent=5 // pred_fallthru
      _
    %p143 = scmp.lt.s32.totalorder %s10, 2
    // Predicated region
    $region17: #{cnn_block_forward.2} parent=5 // pred_check
      %p144 = pneg %p143
    $region18: #{cnn_block_forward.2} parent=5 // pred_check_branch
      %146 = sbr.rel (%p144) target = $region20
    $region19: #{cnn_block_forward.2} parent=5 // pred_region
      // Predicated region
      $region21: #{cnn_block_forward.2} parent=19 // pred_check
        %p147 = pneg %p42
      $region22: #{cnn_block_forward.2} parent=19 // pred_check_branch
        %149 = sbr.rel (%p147) target = $region24
      $region23: #{cnn_block_forward.2} parent=19 // pred_region
        %p150 = scmp.lt.s32.totalorder %s17, 1
        %s151 = scalar_select %p150, %s17, 1
        %s152 = smul.addr %s151, 3
        %s153 = smul.addr %s152, 8
        %s154 = scalar_lea.vmem %s0, %s153
      $region24: #{cnn_block_forward.2} parent=19 // pred_fallthru
        _
    $region20: #{cnn_block_forward.2} parent=5 // pred_fallthru
      _
    %p155 = scmp.le.s32.totalorder 1, %s10
    %p156 = scmp.lt.s32.totalorder %s10, 3
    %p157 = pnand %p155, %p156
    %p158 = pneg %p157
    // Predicated region
    $region25: #{cnn_block_forward.2} parent=5 // pred_check
      _
    $region26: #{cnn_block_forward.2} parent=5 // pred_check_branch
      %160 = sbr.rel (%p157) target = $region28
    $region27: #{cnn_block_forward.2} parent=5 // pred_region
      %s161 = ssub.s32 %s10, 1
      %p162 = scmp.lt.s32.totalorder %s19, 1
      %s163 = scalar_select %p162, %s19, 1
      %s164 = smul.addr %s163, 3
      %s165 = smul.addr %s164, 8
      %s166 = scalar_lea.vmem %s0, %s165
      %p167 = pneg %p48
      %p168 = pneg %p45
      %p169 = pneg %p69
      %p170 = pneg %p66
      %p171 = pneg %p97
      %p172 = pneg %p94
      %s173 = smul.u32 2, %s20
      %p174 = scmp.lt.s32.totalorder %s19, 1
      %s175 = scalar_select %p174, %s19, 1
      %p176 = scmp.lt.s32.totalorder %s173, 1
      %s177 = scalar_select %p176, %s173, 1
      %s178 = smul.addr %s175, 2
      %s179 = sadd.s32 %s177, %s178
      %s180 = smul.addr %s179, 8
      %s181 = scalar_lea.vmem %s2, %s180
      %p182 = pneg %p125
      %p183 = pneg %p122
      %s184 = sadd.s32 %s19, %s20
      %p185 = scmp.lt.s32.totalorder %s184, 1
      %s186 = scalar_select %p185, %s184, 1
      %s187 = smul.addr %s186, 8
      %s188 = scalar_lea.vmem %s3, %s187
      %p189 = scmp.lt.s32.totalorder %s19, 1
      %s190 = scalar_select %p189, %s19, 1
      %s191 = smul.addr %s190, 3
      %s192 = smul.addr %s191, 8
      %s193 = scalar_lea.vmem %s0, %s192
      %s194 = smul.u32 2, %s20
      %p195 = scmp.lt.s32.totalorder %s19, 1
      %s196 = scalar_select %p195, %s19, 1
      %p197 = scmp.lt.s32.totalorder %s194, 1
      %s198 = scalar_select %p197, %s194, 1
      %s199 = smul.addr %s196, 2
      %s200 = sadd.s32 %s198, %s199
      %s201 = smul.addr %s200, 8
      %s202 = scalar_lea.vmem %s2, %s201
      %s203 = smul.u32 2, %s20
      %s204 = sadd.s32 %s19, %s20
      %p205 = scmp.lt.s32.totalorder %s204, 1
      %s206 = scalar_select %p205, %s204, 1
      %s207 = smul.addr %s206, 8
      %s208 = scalar_lea.vmem %s3, %s207
      %s209 = sadd.s32 %s19, %s20
      %s210 = smul.u32 %s20, 16
      %s211 = scalar_lea.vmem %s193, %s210
      %v212 = vld [vmem:[%s211] sm:$0xff]
      %v213 = vld [vmem:[%s211 + $0x8] sm:$0xff]
      %v214 = vld [vmem:[%s1] sm:$0xf]
      %s215 = sadd.s32 %s210, 1
      %s216 = scalar_lea.vmem %s193, %s215
      %v217 = vld [vmem:[%s216] sm:$0xff]
      %v218 = vld [vmem:[%s216 + $0x8] sm:$0xff]
      %s219 = scalar_lea.vmem %s1, 4
      %v220 = vld [vmem:[%s219] sm:$0xf]
      %vm221 = vcmask 31744
      %v223 = vsel %vm221, %v217, 0
      %v226 = vsel %vm221, %v218, 0
      %vm228 = vcmask 1043456
      %v230 = vsel %vm228, %v220, 0
      %232 = vmatpush.msra.mxu0 0.0
      %233 = vmatpush.msra.mxu0 0.0
      %234 = vmatpush.msra.mxu0 0.0
      %235 = vmatpush.msra.mxu0 0.0
      %236 = vmatpush.msra.mxu0 0.0
      %237 = vmatpush.msra.mxu0 0.0
      %238 = vmatpush.msra.mxu0 0.0
      %239 = vmatpush.msra.mxu0 0.0
      %240 = vmatpush.msra.mxu0 0.0
      %241 = vmatpush.msra.mxu0 0.0
      %242 = vmatpush.msra.mxu0 0.0
      %243 = vmatpush.msra.mxu0 0.0
      %244 = vmatpush.msra.mxu0 0.0
      %245 = vmatpush.msra.mxu0 0.0
      %246 = vmatpush.msra.mxu0 0.0
      %247 = vmatpush.msra.mxu0 %v230
      %248 = vmatmul.f32.gmra.mxu0 %v223
      %v249 = vpop.f32.mrf.mxu0
      %v250 = vadd.f32 0.0, %v249
      %251 = vmatmul.f32.gmra.mxu0 %v226
      %v252 = vpop.f32.mrf.mxu0
      %v253 = vadd.f32 0.0, %v252
      %254 = vdwg.mxu0
      %v256 = vsel %vm221, %v212, 0
      %v259 = vsel %vm221, %v213, 0
      %v262 = vsel %vm228, %v214, 0
      %264 = vmatpush.msra.mxu0 0.0
      %265 = vmatpush.msra.mxu0 0.0
      %266 = vmatpush.msra.mxu0 0.0
      %267 = vmatpush.msra.mxu0 0.0
      %268 = vmatpush.msra.mxu0 0.0
      %269 = vmatpush.msra.mxu0 0.0
      %270 = vmatpush.msra.mxu0 0.0
      %271 = vmatpush.msra.mxu0 0.0
      %272 = vmatpush.msra.mxu0 0.0
      %273 = vmatpush.msra.mxu0 0.0
      %274 = vmatpush.msra.mxu0 0.0
      %275 = vmatpush.msra.mxu0 0.0
      %276 = vmatpush.msra.mxu0 0.0
      %277 = vmatpush.msra.mxu0 0.0
      %278 = vmatpush.msra.mxu0 0.0
      %279 = vmatpush.msra.mxu0 %v262
      %280 = vmatmul.f32.gmra.mxu0 %v256
      %v281 = vpop.f32.mrf.mxu0
      %v282 = vadd.f32 %v250, %v281
      %283 = vmatmul.f32.gmra.mxu0 %v259
      %v284 = vpop.f32.mrf.mxu0
      %v285 = vadd.f32 %v253, %v284
      %286 = vdwg.mxu0
      %s287 = sadd.s32 %s210, 2
      %s288 = scalar_lea.vmem %s193, %s287
      %v289 = vld [vmem:[%s288] sm:$0xff]
      %v290 = vld [vmem:[%s288 + $0x8] sm:$0xff]
      %s291 = scalar_lea.vmem %s1, 8
      %v292 = vld [vmem:[%s291] sm:$0xf]
      %v294 = vsel %vm221, %v289, 0
      %v297 = vsel %vm221, %v290, 0
      %v300 = vsel %vm228, %v292, 0
      %302 = vmatpush.msra.mxu0 0.0
      %303 = vmatpush.msra.mxu0 0.0
      %304 = vmatpush.msra.mxu0 0.0
      %305 = vmatpush.msra.mxu0 0.0
      %306 = vmatpush.msra.mxu0 0.0
      %307 = vmatpush.msra.mxu0 0.0
      %308 = vmatpush.msra.mxu0 0.0
      %309 = vmatpush.msra.mxu0 0.0
      %310 = vmatpush.msra.mxu0 0.0
      %311 = vmatpush.msra.mxu0 0.0
      %312 = vmatpush.msra.mxu0 0.0
      %313 = vmatpush.msra.mxu0 0.0
      %314 = vmatpush.msra.mxu0 0.0
      %315 = vmatpush.msra.mxu0 0.0
      %316 = vmatpush.msra.mxu0 0.0
      %317 = vmatpush.msra.mxu0 %v300
      %318 = vmatmul.f32.gmra.mxu0 %v294
      %v319 = vpop.f32.mrf.mxu0
      %v320 = vadd.f32 0.0, %v319
      %321 = vmatmul.f32.gmra.mxu0 %v297
      %v322 = vpop.f32.mrf.mxu0
      %v323 = vadd.f32 0.0, %v322
      %324 = vdwg.mxu0
      %v325 = vadd.f32 %v282, %v320
      %v326 = vadd.f32 %v285, %v323
      %327 = vst [vmem:[%s202] sm:$0xff] %v325
      %328 = vst [vmem:[%s202 + $0x8] sm:$0xff] %v326
      %v329 = vlaneseq
      %v330 = vshrl.u32 %v329, 7
      %v331 = vadd.s32 %v330, 8
      %v332 = vstv %s210
      %v333 = vadd.s32 %v332, %v330
      %v334 = vadd.s32 %v332, %v331
      %vm335 = vcmp.lt.s32.totalorder %v333, 16
      %vm336 = vcmp.lt.s32.totalorder %v334, 16
      %v337 = vsel %vm335, 1, 0
      %v338 = vsel %vm336, 1, 0
      %v339 = vcvt.s32.f32 %v337
      %v340 = vcvt.s32.f32 %v338
      %v341 = vmul.f32 %v325, %v339
      %v342 = vmul.f32 %v326, %v340
      %v343 = vadd.f32 %v341, %v342
      %v344 = vrot.slane %v343, 4
      %v345 = vadd.f32 %v343, %v344
      %v346 = vrot.slane %v345, 2
      %v347 = vadd.f32 %v345, %v346
      %v348 = vrot.slane %v347, 1
      %v349 = vadd.f32 %v347, %v348
      %v350 = vmul.f32 %v341, %v341
      %v351 = vmul.f32 %v342, %v342
      %v352 = vadd.f32 %v350, %v351
      %v353 = vrot.slane %v352, 4
      %v354 = vadd.f32 %v352, %v353
      %v355 = vrot.slane %v354, 2
      %v356 = vadd.f32 %v354, %v355
      %v357 = vrot.slane %v356, 1
      %v358 = vadd.f32 %v356, %v357
      %vm359 = vcmask 1040384
      %v360 = vsel %vm359, %v349, %v358
      %vm361 = vcmask 1041408
      %v362 = vsel %vm361, %v360, 0.0
      %363 = vst [vmem:[%s208] sm:$0xff] %v362
      %s364 = smul.u32 2, %s20
      %p365 = scmp.lt.s32.totalorder %s19, 1
      %s366 = scalar_select %p365, %s19, 1
      %p367 = scmp.lt.s32.totalorder %s364, 1
      %s368 = scalar_select %p367, %s364, 1
      %s369 = smul.addr %s366, 2
      %s370 = sadd.s32 %s368, %s369
      %s371 = smul.addr %s370, 8
      %s372 = scalar_lea.vmem %s2, %s371
      %s373 = sadd.s32 %s19, %s20
      %p374 = scmp.lt.s32.totalorder %s373, 1
      %s375 = scalar_select %p374, %s373, 1
      %s376 = smul.addr %s375, 8
      %s377 = scalar_lea.vmem %s3, %s376
      // Predicated region
      $region29: #{cnn_block_forward.2} parent=27 // pred_check
        %p378 = pneg %p94
      $region30: #{cnn_block_forward.2} parent=27 // pred_check_branch
        %380 = sbr.rel (%p378) target = $region32
      $region31: #{cnn_block_forward.2} parent=27 // pred_region
        %s381 = smul.u32 2, %s20
      $region32: #{cnn_block_forward.2} parent=27 // pred_fallthru
        _
      // Predicated region
      $region33: #{cnn_block_forward.2} parent=27 // pred_check
        %p382 = pneg %p122
      $region34: #{cnn_block_forward.2} parent=27 // pred_check_branch
        %384 = sbr.rel (%p382) target = $region36
      $region35: #{cnn_block_forward.2} parent=27 // pred_region
        %s385 = sadd.s32 %s19, %s20
      $region36: #{cnn_block_forward.2} parent=27 // pred_fallthru
        _
    $region28: #{cnn_block_forward.2} parent=5 // pred_fallthru
      _
    %p386 = scmp.le.s32.totalorder 2, %s10
    // Predicated region
    $region37: #{cnn_block_forward.2} parent=5 // pred_check
      %p387 = pneg %p386
    $region38: #{cnn_block_forward.2} parent=5 // pred_check_branch
      %389 = sbr.rel (%p387) target = $region40
    $region39: #{cnn_block_forward.2} parent=5 // pred_region
      %s390 = ssub.s32 %s10, 2
      // Predicated region
      $region41: #{cnn_block_forward.2} parent=39 // pred_check
        %p391 = pneg %p100
      $region42: #{cnn_block_forward.2} parent=39 // pred_check_branch
        %393 = sbr.rel (%p391) target = $region44
      $region43: #{cnn_block_forward.2} parent=39 // pred_region
        %s394 = smul.u32 2, %s22
        %p395 = scmp.lt.s32.totalorder %s21, 1
        %s396 = scalar_select %p395, %s21, 1
        %p397 = scmp.lt.s32.totalorder %s394, 1
        %s398 = scalar_select %p397, %s394, 1
        %s399 = smul.addr %s396, 2
        %s400 = sadd.s32 %s398, %s399
        %s401 = smul.addr %s400, 8
        %s402 = scalar_lea.vmem %s2, %s401
      $region44: #{cnn_block_forward.2} parent=39 // pred_fallthru
        _
      // Predicated region
      $region45: #{cnn_block_forward.2} parent=39 // pred_check
        %p403 = pneg %p128
      $region46: #{cnn_block_forward.2} parent=39 // pred_check_branch
        %405 = sbr.rel (%p403) target = $region48
      $region47: #{cnn_block_forward.2} parent=39 // pred_region
        %s406 = sadd.s32 %s21, %s22
        %p407 = scmp.lt.s32.totalorder %s406, 1
        %s408 = scalar_select %p407, %s406, 1
        %s409 = smul.addr %s408, 8
        %s410 = scalar_lea.vmem %s3, %s409
      $region48: #{cnn_block_forward.2} parent=39 // pred_fallthru
        _
    $region40: #{cnn_block_forward.2} parent=5 // pred_fallthru
      _
  $region6: #{cnn_block_forward.2} parent=0 // loop_footer
    %s14 = sadd.s32 1, %s10
  $region7: #{cnn_block_forward.2} parent=0 // loop_footer_branch
    %9 = sbr.rel target = $region3
  $region8: #{cnn_block_forward.2} parent=0 // loop_exit
    _

</llo_original>
